<compile_context>
chip_gen: v7x
topology: tpu7x:2x2x1
jax: 0.10.0
libtpu: 0.0.40
codegen_flags: <defaults>
</compile_context>

<pallas_src>
import functools
import math

import jax
import jax.numpy as jnp
from jax.experimental import pallas as pl
from jax.experimental.pallas import tpu as pltpu

N_EMBD = 64
HIDDEN = 4 * N_EMBD  # 256


def feedforward_kernel(x_ref, w1_ref, b1_ref, w2_ref, b2_ref, o_ref):
    # x_ref: (tm, 64) f32; w1/w2: bf16; b1/b2: f32; o_ref: (tm, 64) f32.
    x = x_ref[...]
    h = jnp.dot(x.astype(jnp.bfloat16), w1_ref[...],
                preferred_element_type=jnp.float32) + b1_ref[...]
    h = jnp.maximum(h, 0.0)  # ReLU in f32 (VPU-friendly on all generations)
    y = jnp.dot(h.astype(jnp.bfloat16), w2_ref[...],
                preferred_element_type=jnp.float32) + b2_ref[...]
    # TODO(synk): nn.Dropout(0.1) training mode (pltpu.prng_seed +
    # prng_random_bits mask + 1/0.9 rescale) not implemented; eval identity.
    o_ref[...] = y.astype(o_ref.dtype)


@functools.partial(jax.jit, static_argnames=("num_row_blocks",))
def feedforward(x, w1, b1, w2, b2, *, num_row_blocks=1):
    """FeedForward forward pass for x of shape (..., N_EMBD)."""
    orig_shape = x.shape
    rows = math.prod(orig_shape[:-1])
    assert rows % num_row_blocks == 0, "rows must divide evenly; no padding path"
    tm = rows // num_row_blocks
    assert tm % 8 == 0, "row tile must be a multiple of the 8-sublane granule"

    x2 = x.reshape(rows, N_EMBD)           # metadata-only for contiguous input
    if x2.dtype != jnp.float32:
        x2 = x2.astype(jnp.float32)

    y2 = pl.pallas_call(
        feedforward_kernel,
        out_shape=jax.ShapeDtypeStruct((rows, N_EMBD), jnp.float32),
        grid_spec=pltpu.PrefetchScalarGridSpec(
            num_scalar_prefetch=0,
            grid=(num_row_blocks,),                              # default: (1,)
            in_specs=[
                pl.BlockSpec((tm, N_EMBD), lambda i: (i, 0)),     # x rows
                pl.BlockSpec((N_EMBD, HIDDEN), lambda i: (0, 0)), # w1 (resident)
                pl.BlockSpec((1, HIDDEN), lambda i: (0, 0)),      # b1
                pl.BlockSpec((HIDDEN, N_EMBD), lambda i: (0, 0)), # w2 (resident)
                pl.BlockSpec((1, N_EMBD), lambda i: (0, 0)),      # b2
            ],
            out_specs=pl.BlockSpec((tm, N_EMBD), lambda i: (i, 0)),
        ),
        # With one grid step, "parallel" vs "arbitrary" changes nothing; actual
        # v7x dual-TC use would need CORE_PARALLEL and is not worth it here.
        compiler_params=pltpu.CompilerParams(
            dimension_semantics=("arbitrary",)),
    )(x2, w1, b1, w2, b2)

    return y2.reshape(orig_shape)


def _ref_forward(x, w1, b1, w2, b2):
    """Pure-JAX reference with the same dtype flow (bf16 MXU inputs, f32 acc)."""
    x2 = x.reshape(-1, N_EMBD).astype(jnp.float32)
    h = jnp.dot(x2.astype(jnp.bfloat16), w1,
                preferred_element_type=jnp.float32) + b1
    h = jnp.maximum(h, 0.0)
    y = jnp.dot(h.astype(jnp.bfloat16), w2,
                preferred_element_type=jnp.float32) + b2
    return y.reshape(x.shape)


if __name__ == "__main__":
    key = jax.random.PRNGKey(0)
    k1, k2, k3, k4, kx = jax.random.split(key, 5)
    std = 0.02

    # Weights in bf16 (MXU operands); biases in f32 (VPU adds).
    w1 = (std * jax.random.normal(k1, (N_EMBD, HIDDEN))).astype(jnp.bfloat16)
    b1 = (std * jax.random.normal(k2, (1, HIDDEN))).astype(jnp.float32)
    w2 = (std * jax.random.normal(k3, (HIDDEN, N_EMBD))).astype(jnp.bfloat16)
    b2 = (std * jax.random.normal(k4, (1, N_EMBD))).astype(jnp.float32)

    B, T = 2, 32  # (batch, seq) of n_embd=64 activations, as in the model
    x = jax.random.normal(kx, (B, T, N_EMBD), dtype=jnp.float32)

    y = feedforward(x, w1, b1, w2, b2)
    y = jax.block_until_ready(y)
    assert y.shape == (B, T, N_EMBD)

    y_ref = _ref_forward(x, w1, b1, w2, b2)
    max_err = float(jnp.max(jnp.abs(y - y_ref)))
    assert max_err < 2e-3, f"mismatch vs reference: {max_err}"

    print("KERNEL_OK")
</pallas_src>

<mosaic_0001>
module attributes {stable_mosaic.version = 11 : i64} {
  func.func @feedforward_kernel(%arg0: i32, %arg1: memref<64x64xf32, #tpu.memory_space<vmem>>, %arg2: memref<64x256xbf16, #tpu.memory_space<vmem>>, %arg3: memref<1x256xf32, #tpu.memory_space<vmem>>, %arg4: memref<256x64xbf16, #tpu.memory_space<vmem>>, %arg5: memref<1x64xf32, #tpu.memory_space<vmem>>, %arg6: memref<64x64xf32, #tpu.memory_space<vmem>>) attributes {dimension_semantics = [#tpu.dimension_semantics<arbitrary>], iteration_bounds = array<i64: 1>, scalar_prefetch = 0 : i64, scratch_operands = 0 : i64, tpu.core_type = #tpu.core_type<tc>, window_params = [{transform_indices = @transform_0, window_bounds = array<i64: 64, 64>}, {pipeline_mode = #tpu.pipeline_mode<synchronous>, transform_indices = @transform_1, window_bounds = array<i64: 64, 256>}, {pipeline_mode = #tpu.pipeline_mode<synchronous>, transform_indices = @transform_2, window_bounds = array<i64: 1, 256>}, {pipeline_mode = #tpu.pipeline_mode<synchronous>, transform_indices = @transform_3, window_bounds = array<i64: 256, 64>}, {pipeline_mode = #tpu.pipeline_mode<synchronous>, transform_indices = @transform_4, window_bounds = array<i64: 1, 64>}, {transform_indices = @transform_5, window_bounds = array<i64: 64, 64>}]} {
    %c0 = arith.constant 0 : index
    %c0_0 = arith.constant 0 : index
    %0 = vector.load %arg1[%c0, %c0_0] : memref<64x64xf32, #tpu.memory_space<vmem>>, vector<64x64xf32>
    %1 = arith.truncf %0 : vector<64x64xf32> to vector<64x64xbf16>
    %c0_1 = arith.constant 0 : index
    %c0_2 = arith.constant 0 : index
    %2 = vector.load %arg2[%c0_1, %c0_2] : memref<64x256xbf16, #tpu.memory_space<vmem>>, vector<64x256xbf16>
    %cst = arith.constant dense<0.000000e+00> : vector<64x256xf32>
    %3 = tpu.matmul %1, %2, %cst {dimension_numbers = #tpu.dot_dimension_numbers<[1], [0], [0], [1], [0, 0, 1, 1], [], []>} : vector<64x64xbf16>, vector<64x256xbf16>, vector<64x256xf32> -> vector<64x256xf32>
    %c0_3 = arith.constant 0 : index
    %c0_4 = arith.constant 0 : index
    %4 = vector.load %arg3[%c0_3, %c0_4] : memref<1x256xf32, #tpu.memory_space<vmem>>, vector<1x256xf32>
    %5 = vector.broadcast %4 : vector<1x256xf32> to vector<64x256xf32>
    %6 = arith.addf %3, %5 : vector<64x256xf32>
    %cst_5 = arith.constant 0.000000e+00 : f32
    %7 = vector.broadcast %cst_5 : f32 to vector<64x256xf32>
    %8 = arith.maximumf %6, %7 : vector<64x256xf32>
    %9 = arith.truncf %8 : vector<64x256xf32> to vector<64x256xbf16>
    %c0_6 = arith.constant 0 : index
    %c0_7 = arith.constant 0 : index
    %10 = vector.load %arg4[%c0_6, %c0_7] : memref<256x64xbf16, #tpu.memory_space<vmem>>, vector<256x64xbf16>
    %cst_8 = arith.constant dense<0.000000e+00> : vector<64x64xf32>
    %11 = tpu.matmul %9, %10, %cst_8 {dimension_numbers = #tpu.dot_dimension_numbers<[1], [0], [0], [1], [0, 0, 1, 1], [], []>} : vector<64x256xbf16>, vector<256x64xbf16>, vector<64x64xf32> -> vector<64x64xf32>
    %c0_9 = arith.constant 0 : index
    %c0_10 = arith.constant 0 : index
    %12 = vector.load %arg5[%c0_9, %c0_10] : memref<1x64xf32, #tpu.memory_space<vmem>>, vector<1x64xf32>
    %13 = vector.broadcast %12 : vector<1x64xf32> to vector<64x64xf32>
    %14 = arith.addf %11, %13 : vector<64x64xf32>
    %c0_11 = arith.constant 0 : index
    %c0_12 = arith.constant 0 : index
    %15 = vector.load %arg6[%c0_11, %c0_12] : memref<64x64xf32, #tpu.memory_space<vmem>>, vector<64x64xf32>
    tpu.vector_store %arg6[%c0_11, %c0_12], %14 {strides = array<i32>} : memref<64x64xf32, #tpu.memory_space<vmem>>, vector<64x64xf32>,
    return
  }
  func.func @transform_0(%arg0: i32) -> (i32, i32) {
    %c0_i32 = arith.constant 0 : i32
    %c0_i32_0 = arith.constant 0 : i32
    return %arg0, %c0_i32 : i32, i32
  }
  func.func @transform_1(%arg0: i32) -> (i32, i32) {
    %c0_i32 = arith.constant 0 : i32
    %c0_i32_0 = arith.constant 0 : i32
    %c0_i32_1 = arith.constant 0 : i32
    return %c0_i32, %c0_i32_0 : i32, i32
  }
  func.func @transform_2(%arg0: i32) -> (i32, i32) {
    %c0_i32 = arith.constant 0 : i32
    %c0_i32_0 = arith.constant 0 : i32
    %c0_i32_1 = arith.constant 0 : i32
    return %c0_i32, %c0_i32_0 : i32, i32
  }
  func.func @transform_3(%arg0: i32) -> (i32, i32) {
    %c0_i32 = arith.constant 0 : i32
    %c0_i32_0 = arith.constant 0 : i32
    %c0_i32_1 = arith.constant 0 : i32
    return %c0_i32, %c0_i32_0 : i32, i32
  }
  func.func @transform_4(%arg0: i32) -> (i32, i32) {
    %c0_i32 = arith.constant 0 : i32
    %c0_i32_0 = arith.constant 0 : i32
    %c0_i32_1 = arith.constant 0 : i32
    return %c0_i32, %c0_i32_0 : i32, i32
  }
  func.func @transform_5(%arg0: i32) -> (i32, i32) {
    %c0_i32 = arith.constant 0 : i32
    %c0_i32_0 = arith.constant 0 : i32
    return %arg0, %c0_i32 : i32, i32
  }
}

</mosaic_0001>

<llo_original>
// kernel: feedforward.1
$region0: #{feedforward.1}
  #allocation0 [shape = 'u32[]', space=smem, size = 0x4, offset = 0x4, fixed_abs, tag = 'smem constant byte address 0x4 - core index']
  #allocation1 [shape = 'u32[144,128]{1,0:T(1,128)}', space=vmem, size = 0x12000, scoped, tag = 'internal scratch']
  %s0 = inlined_call_operand.vmem [shape: f32[64,64], index: 0, kind: input, shape index: {}]
  %s1 = inlined_call_operand.vmem [shape: bf16[64,256], index: 1, kind: input, shape index: {}]
  %s2 = inlined_call_operand.vmem [shape: f32[1,256], index: 2, kind: input, shape index: {}]
  %s3 = inlined_call_operand.vmem [shape: bf16[256,64], index: 3, kind: input, shape index: {}]
  %s4 = inlined_call_operand.vmem [shape: f32[1,64], index: 4, kind: input, shape index: {}]
  %s5 = inlined_call_operand.hbm [shape: f32[64,64], index: 5, kind: output, shape index: {}]
  %s6 = sld [smem:[#allocation0]]
  $region30: #{feedforward.1} parent=0
    _
  %s8 = ssub.s32 1, %s6
  %s9 = scalar_select 0, %s8, %s6
  $region1: #{feedforward.1} parent=0
    #allocation2 [shape = 'u8[32768]{0}', space=vmem, size = 0x8000, scoped, tag = 'output window, operand 0, single buffered']
    #allocation3 [shape = 's32[1]{0}', space=sflag, size = 0x4, scoped, tag = 'scoped memory for feedforward.1']
    %10 = vsyncpa [#allocation3], 0
    // Predicated region
    $region2: #{feedforward.1} parent=1 // pred_check
      _
    $region3: #{feedforward.1} parent=1 // pred_check_branch
      %12 = sbr.rel (0) target = $region5
    $region4: #{feedforward.1} parent=1 // pred_region
      _
    $region5: #{feedforward.1} parent=1 // pred_fallthru
      _
    // Predicated region
    $region6: #{feedforward.1} parent=1 // pred_check
      _
    $region7: #{feedforward.1} parent=1 // pred_check_branch
      %14 = sbr.rel (0) target = $region9
    $region8: #{feedforward.1} parent=1 // pred_region
      _
    $region9: #{feedforward.1} parent=1 // pred_fallthru
      _
    // Predicated region
    $region10: #{feedforward.1} parent=1 // pred_check
      _
    $region11: #{feedforward.1} parent=1 // pred_check_branch
      %16 = sbr.rel (0) target = $region13
    $region12: #{feedforward.1} parent=1 // pred_region
      _
    $region13: #{feedforward.1} parent=1 // pred_fallthru
      _
    // Predicated region
    $region14: #{feedforward.1} parent=1 // pred_check
      _
    $region15: #{feedforward.1} parent=1 // pred_check_branch
      %18 = sbr.rel (0) target = $region17
    $region16: #{feedforward.1} parent=1 // pred_region
      _
    $region17: #{feedforward.1} parent=1 // pred_fallthru
      _
    // Predicated region
    $region18: #{feedforward.1} parent=1 // pred_check
      _
    $region19: #{feedforward.1} parent=1 // pred_check_branch
      %20 = sbr.rel (0) target = $region21
    $region20: #{feedforward.1} parent=1 // pred_region
      _
    $region21: #{feedforward.1} parent=1 // pred_fallthru
      _
    %v22 = vld [vmem:[%s0] sm:$0xff]
    %v23 = vld [vmem:[%s0 + $0x8] sm:$0xff]
    %v24 = vld [vmem:[%s0 + $0x10] sm:$0xff]
    %v25 = vld [vmem:[%s0 + $0x18] sm:$0xff]
    %v26 = vld [vmem:[%s0 + $0x20] sm:$0xff]
    %v27 = vld [vmem:[%s0 + $0x28] sm:$0xff]
    %v28 = vld [vmem:[%s0 + $0x30] sm:$0xff]
    %v29 = vld [vmem:[%s0 + $0x38] sm:$0xff]
    %v30 = vpack.c.bf16 %v23, %v22
    %v31 = vpack.c.bf16 %v25, %v24
    %v32 = vpack.c.bf16 %v27, %v26
    %v33 = vpack.c.bf16 %v29, %v28
    %v34 = vld [vmem:[%s1] sm:$0xff]
    %v35 = vld [vmem:[%s1 + $0x8] sm:$0xff]
    %v36 = vld [vmem:[%s1 + $0x10] sm:$0xff]
    %v37 = vld [vmem:[%s1 + $0x18] sm:$0xff]
    %v38 = vld [vmem:[%s1 + $0x20] sm:$0xff]
    %v39 = vld [vmem:[%s1 + $0x28] sm:$0xff]
    %v40 = vld [vmem:[%s1 + $0x30] sm:$0xff]
    %v41 = vld [vmem:[%s1 + $0x38] sm:$0xff]
    %v42 = vld [vmem:[%s2] sm:$0x3]
    %v44 = vlaneseq
    %v45 = vshrl.u32 %v44, 7
    %v46 = vsub.s32 0, %v45
    %v47 = vrot.slane %v42, %v46
    %v48 = vlaneseq
    %v49 = vshrl.u32 %v48, 7
    %v50 = vsub.s32 1, %v49
    %v51 = vrot.slane %v42, %v50
    %v62 = vunpack.c.l.b16 %v34
    %v63 = vunpack.c.h.b16 %v34
    %v64 = vunpack.c.l.b16 %v35
    %v65 = vunpack.c.h.b16 %v35
    %v66 = vunpack.c.l.b16 %v36
    %v67 = vunpack.c.h.b16 %v36
    %v68 = vunpack.c.l.b16 %v37
    %v69 = vunpack.c.h.b16 %v37
    %v70 = vunpack.c.l.b16 %v38
    %v71 = vunpack.c.h.b16 %v38
    %v72 = vunpack.c.l.b16 %v39
    %v73 = vunpack.c.h.b16 %v39
    %v74 = vunpack.c.l.b16 %v40
    %v75 = vunpack.c.h.b16 %v40
    %v76 = vunpack.c.l.b16 %v41
    %v77 = vunpack.c.h.b16 %v41
    %v78 = vpack.c.b16 %v64, %v62
    %v79 = vpack.c.b16 %v65, %v63
    %v80 = vpack.c.b16 %v68, %v66
    %v81 = vpack.c.b16 %v69, %v67
    %v82 = vpack.c.b16 %v72, %v70
    %v83 = vpack.c.b16 %v73, %v71
    %v84 = vpack.c.b16 %v76, %v74
    %v85 = vpack.c.b16 %v77, %v75
    %vm94 = vcmask 523264
    %v96 = vsel %vm94, %v30, 0
    %v99 = vsel %vm94, %v31, 0
    %v102 = vsel %vm94, %v32, 0
    %v105 = vsel %vm94, %v33, 0
    %107 = vmatprep.subr.bf16.mxu0 %v79
    %108 = vmatpush1.bf16.msra.mxu0 %v78
    %109 = vmatprep.subr.bf16.mxu0 %v81
    %110 = vmatpush1.bf16.msra.mxu0 %v80
    %111 = vmatprep.subr.bf16.mxu0 %v83
    %112 = vmatpush1.bf16.msra.mxu0 %v82
    %113 = vmatprep.subr.bf16.mxu0 %v85
    %114 = vmatpush1.bf16.msra.mxu0 %v84
    %115 = vmatprep.subr.bf16.mxu0 0
    %116 = vmatpush1.bf16.msra.mxu0 0
    %117 = vmatprep.subr.bf16.mxu0 0
    %118 = vmatpush1.bf16.msra.mxu0 0
    %119 = vmatprep.subr.bf16.mxu0 0
    %120 = vmatpush1.bf16.msra.mxu0 0
    %121 = vmatprep.subr.bf16.mxu0 0
    %122 = vmatpush1.bf16.msra.mxu0 0
    %123 = vmatprep.subr.bf16.mxu0 0
    %124 = vmatpush1.bf16.msra.mxu0 0
    %125 = vmatprep.subr.bf16.mxu0 0
    %126 = vmatpush1.bf16.msra.mxu0 0
    %127 = vmatprep.subr.bf16.mxu0 0
    %128 = vmatpush1.bf16.msra.mxu0 0
    %129 = vmatprep.subr.bf16.mxu0 0
    %130 = vmatpush1.bf16.msra.mxu0 0
    %131 = vmatprep.subr.bf16.mxu0 0
    %132 = vmatpush1.bf16.msra.mxu0 0
    %133 = vmatprep.subr.bf16.mxu0 0
    %134 = vmatpush1.bf16.msra.mxu0 0
    %135 = vmatprep.subr.bf16.mxu0 0
    %136 = vmatpush1.bf16.msra.mxu0 0
    %137 = vmatprep.subr.bf16.mxu0 0
    %138 = vmatpush1.bf16.msra.mxu0 0
    %139 = vmatprep.mubr.bf16.mxu0 0
    %140 = vmatmul.mubr.bf16.gmra.mrb[0].mxu0 %v96
    %v141 = vpop.f32.mrb[0].mxu0
    %v142 = vadd.f32 %v47, %v141
    %v143 = vpop.f32.mrb[0].mxu0
    %v144 = vadd.f32 %v51, %v143
    %v145 = vpop.f32.mrb[0].mxu0
    %v146 = vadd.f32 %v47, %v145
    %v147 = vpop.f32.mrb[0].mxu0
    %v148 = vadd.f32 %v51, %v147
    %149 = vmatprep.mubr.bf16.mxu0 0
    %150 = vmatmul.mubr.bf16.gmra.mrb[0].mxu0 %v99
    %v151 = vpop.f32.mrb[0].mxu0
    %v152 = vadd.f32 %v47, %v151
    %v153 = vpop.f32.mrb[0].mxu0
    %v154 = vadd.f32 %v51, %v153
    %v155 = vpop.f32.mrb[0].mxu0
    %v156 = vadd.f32 %v47, %v155
    %v157 = vpop.f32.mrb[0].mxu0
    %v158 = vadd.f32 %v51, %v157
    %159 = vmatprep.mubr.bf16.mxu0 0
    %160 = vmatmul.mubr.bf16.gmra.mrb[0].mxu0 %v102
    %v161 = vpop.f32.mrb[0].mxu0
    %v162 = vadd.f32 %v47, %v161
    %v163 = vpop.f32.mrb[0].mxu0
    %v164 = vadd.f32 %v51, %v163
    %v165 = vpop.f32.mrb[0].mxu0
    %v166 = vadd.f32 %v47, %v165
    %v167 = vpop.f32.mrb[0].mxu0
    %v168 = vadd.f32 %v51, %v167
    %169 = vmatprep.mubr.bf16.mxu0 0
    %170 = vmatmul.mubr.bf16.gmra.mrb[0].mxu0 %v105
    %v171 = vpop.f32.mrb[0].mxu0
    %v172 = vadd.f32 %v47, %v171
    %v173 = vpop.f32.mrb[0].mxu0
    %v174 = vadd.f32 %v51, %v173
    %v175 = vpop.f32.mrb[0].mxu0
    %v176 = vadd.f32 %v47, %v175
    %v177 = vpop.f32.mrb[0].mxu0
    %v178 = vadd.f32 %v51, %v177
    %179 = vdwg.mxu0
    %v180 = vmax.f32 %v142, 0.0
    %v181 = vmax.f32 %v144, 0.0
    %v182 = vmax.f32 %v146, 0.0
    %v183 = vmax.f32 %v148, 0.0
    %v184 = vmax.f32 %v152, 0.0
    %v185 = vmax.f32 %v154, 0.0
    %v186 = vmax.f32 %v156, 0.0
    %v187 = vmax.f32 %v158, 0.0
    %v188 = vmax.f32 %v162, 0.0
    %v189 = vmax.f32 %v164, 0.0
    %v190 = vmax.f32 %v166, 0.0
    %v191 = vmax.f32 %v168, 0.0
    %v192 = vmax.f32 %v172, 0.0
    %v193 = vmax.f32 %v174, 0.0
    %v194 = vmax.f32 %v176, 0.0
    %v195 = vmax.f32 %v178, 0.0
    %v196 = vpack.c.bf16 %v182, %v180
    %v197 = vpack.c.bf16 %v183, %v181
    %v198 = vpack.c.bf16 %v186, %v184
    %v199 = vpack.c.bf16 %v187, %v185
    %v200 = vpack.c.bf16 %v190, %v188
    %v201 = vpack.c.bf16 %v191, %v189
    %v202 = vpack.c.bf16 %v194, %v192
    %v203 = vpack.c.bf16 %v195, %v193
    %v204 = vld [vmem:[%s3] sm:$0xf]
    %v205 = vld [vmem:[%s3 + $0x4] sm:$0xf]
    %v206 = vld [vmem:[%s3 + $0x8] sm:$0xf]
    %v207 = vld [vmem:[%s3 + $0xc] sm:$0xf]
    %v208 = vld [vmem:[%s3 + $0x10] sm:$0xf]
    %v209 = vld [vmem:[%s3 + $0x14] sm:$0xf]
    %v210 = vld [vmem:[%s3 + $0x18] sm:$0xf]
    %v211 = vld [vmem:[%s3 + $0x1c] sm:$0xf]
    %v212 = vld [vmem:[%s3 + $0x20] sm:$0xf]
    %v213 = vld [vmem:[%s3 + $0x24] sm:$0xf]
    %v214 = vld [vmem:[%s3 + $0x28] sm:$0xf]
    %v215 = vld [vmem:[%s3 + $0x2c] sm:$0xf]
    %v216 = vld [vmem:[%s3 + $0x30] sm:$0xf]
    %v217 = vld [vmem:[%s3 + $0x34] sm:$0xf]
    %v218 = vld [vmem:[%s3 + $0x38] sm:$0xf]
    %v219 = vld [vmem:[%s3 + $0x3c] sm:$0xf]
    %v220 = vld [vmem:[%s3 + $0x40] sm:$0xf]
    %v221 = vld [vmem:[%s3 + $0x44] sm:$0xf]
    %v222 = vld [vmem:[%s3 + $0x48] sm:$0xf]
    %v223 = vld [vmem:[%s3 + $0x4c] sm:$0xf]
    %v224 = vld [vmem:[%s3 + $0x50] sm:$0xf]
    %v225 = vld [vmem:[%s3 + $0x54] sm:$0xf]
    %v226 = vld [vmem:[%s3 + $0x58] sm:$0xf]
    %v227 = vld [vmem:[%s3 + $0x5c] sm:$0xf]
    %v228 = vld [vmem:[%s3 + $0x60] sm:$0xf]
    %v229 = vld [vmem:[%s3 + $0x64] sm:$0xf]
    %v230 = vld [vmem:[%s3 + $0x68] sm:$0xf]
    %v231 = vld [vmem:[%s3 + $0x6c] sm:$0xf]
    %v232 = vld [vmem:[%s3 + $0x70] sm:$0xf]
    %v233 = vld [vmem:[%s3 + $0x74] sm:$0xf]
    %v234 = vld [vmem:[%s3 + $0x78] sm:$0xf]
    %v235 = vld [vmem:[%s3 + $0x7c] sm:$0xf]
    %v236 = vld [vmem:[%s4] sm:$0x1]
    %v238 = vlaneseq
    %v239 = vshrl.u32 %v238, 7
    %v240 = vsub.s32 0, %v239
    %v241 = vrot.slane %v236, %v240
    %v275 = vunpack.c.l.b16 %v204
    %v276 = vunpack.c.l.b16 %v205
    %v277 = vunpack.c.l.b16 %v206
    %v278 = vunpack.c.l.b16 %v207
    %v279 = vunpack.c.l.b16 %v208
    %v280 = vunpack.c.l.b16 %v209
    %v281 = vunpack.c.l.b16 %v210
    %v282 = vunpack.c.l.b16 %v211
    %v283 = vunpack.c.l.b16 %v212
    %v284 = vunpack.c.l.b16 %v213
    %v285 = vunpack.c.l.b16 %v214
    %v286 = vunpack.c.l.b16 %v215
    %v287 = vunpack.c.l.b16 %v216
    %v288 = vunpack.c.l.b16 %v217
    %v289 = vunpack.c.l.b16 %v218
    %v290 = vunpack.c.l.b16 %v219
    %v291 = vunpack.c.l.b16 %v220
    %v292 = vunpack.c.l.b16 %v221
    %v293 = vunpack.c.l.b16 %v222
    %v294 = vunpack.c.l.b16 %v223
    %v295 = vunpack.c.l.b16 %v224
    %v296 = vunpack.c.l.b16 %v225
    %v297 = vunpack.c.l.b16 %v226
    %v298 = vunpack.c.l.b16 %v227
    %v299 = vunpack.c.l.b16 %v228
    %v300 = vunpack.c.l.b16 %v229
    %v301 = vunpack.c.l.b16 %v230
    %v302 = vunpack.c.l.b16 %v231
    %v303 = vunpack.c.l.b16 %v232
    %v304 = vunpack.c.l.b16 %v233
    %v305 = vunpack.c.l.b16 %v234
    %v306 = vunpack.c.l.b16 %v235
    %v307 = vpack.c.b16 %v276, %v275
    %v308 = vpack.c.b16 %v278, %v277
    %v309 = vpack.c.b16 %v280, %v279
    %v310 = vpack.c.b16 %v282, %v281
    %v311 = vpack.c.b16 %v284, %v283
    %v312 = vpack.c.b16 %v286, %v285
    %v313 = vpack.c.b16 %v288, %v287
    %v314 = vpack.c.b16 %v290, %v289
    %v315 = vpack.c.b16 %v292, %v291
    %v316 = vpack.c.b16 %v294, %v293
    %v317 = vpack.c.b16 %v296, %v295
    %v318 = vpack.c.b16 %v298, %v297
    %v319 = vpack.c.b16 %v300, %v299
    %v320 = vpack.c.b16 %v302, %v301
    %v321 = vpack.c.b16 %v304, %v303
    %v322 = vpack.c.b16 %v306, %v305
    %339 = vmatprep.subr.bf16.mxu0 0
    %340 = vmatpush1.bf16.msra.mxu0 %v307
    %341 = vmatprep.subr.bf16.mxu0 0
    %342 = vmatpush1.bf16.msra.mxu0 %v308
    %343 = vmatprep.subr.bf16.mxu0 0
    %344 = vmatpush1.bf16.msra.mxu0 %v309
    %345 = vmatprep.subr.bf16.mxu0 0
    %346 = vmatpush1.bf16.msra.mxu0 %v310
    %347 = vmatprep.subr.bf16.mxu0 0
    %348 = vmatpush1.bf16.msra.mxu0 %v311
    %349 = vmatprep.subr.bf16.mxu0 0
    %350 = vmatpush1.bf16.msra.mxu0 %v312
    %351 = vmatprep.subr.bf16.mxu0 0
    %352 = vmatpush1.bf16.msra.mxu0 %v313
    %353 = vmatprep.subr.bf16.mxu0 0
    %354 = vmatpush1.bf16.msra.mxu0 %v314
    %355 = vmatprep.subr.bf16.mxu0 0
    %356 = vmatpush1.bf16.msra.mxu0 %v315
    %357 = vmatprep.subr.bf16.mxu0 0
    %358 = vmatpush1.bf16.msra.mxu0 %v316
    %359 = vmatprep.subr.bf16.mxu0 0
    %360 = vmatpush1.bf16.msra.mxu0 %v317
    %361 = vmatprep.subr.bf16.mxu0 0
    %362 = vmatpush1.bf16.msra.mxu0 %v318
    %363 = vmatprep.subr.bf16.mxu0 0
    %364 = vmatpush1.bf16.msra.mxu0 %v319
    %365 = vmatprep.subr.bf16.mxu0 0
    %366 = vmatpush1.bf16.msra.mxu0 %v320
    %367 = vmatprep.subr.bf16.mxu0 0
    %368 = vmatpush1.bf16.msra.mxu0 %v321
    %369 = vmatprep.subr.bf16.mxu0 0
    %370 = vmatpush1.bf16.msra.mxu0 %v322
    %371 = vmatprep.mubr.bf16.mxu0 %v197
    %372 = vmatmul.mubr.bf16.gmra.mrb[0].mxu0 %v196
    %v373 = vpop.f32.mrb[0].mxu0
    %v374 = vadd.f32 %v241, %v373
    %v375 = vpop.f32.mrb[0].mxu0
    %v376 = vpop.f32.mrb[0].mxu0
    %v377 = vadd.f32 %v241, %v376
    %v378 = vpop.f32.mrb[0].mxu0
    %379 = vmatprep.mubr.bf16.mxu0 %v199
    %380 = vmatmul.mubr.bf16.gmra.mrb[0].mxu0 %v198
    %v381 = vpop.f32.mrb[0].mxu0
    %v382 = vadd.f32 %v241, %v381
    %v383 = vpop.f32.mrb[0].mxu0
    %v384 = vpop.f32.mrb[0].mxu0
    %v385 = vadd.f32 %v241, %v384
    %v386 = vpop.f32.mrb[0].mxu0
    %387 = vmatprep.mubr.bf16.mxu0 %v201
    %388 = vmatmul.mubr.bf16.gmra.mrb[0].mxu0 %v200
    %v389 = vpop.f32.mrb[0].mxu0
    %v390 = vadd.f32 %v241, %v389
    %v391 = vpop.f32.mrb[0].mxu0
    %v392 = vpop.f32.mrb[0].mxu0
    %v393 = vadd.f32 %v241, %v392
    %v394 = vpop.f32.mrb[0].mxu0
    %395 = vmatprep.mubr.bf16.mxu0 %v203
    %396 = vmatmul.mubr.bf16.gmra.mrb[0].mxu0 %v202
    %v397 = vpop.f32.mrb[0].mxu0
    %v398 = vadd.f32 %v241, %v397
    %v399 = vpop.f32.mrb[0].mxu0
    %v400 = vpop.f32.mrb[0].mxu0
    %v401 = vadd.f32 %v241, %v400
    %v402 = vpop.f32.mrb[0].mxu0
    %403 = vdwg.mxu0
    %404 = vst.msk [vmem:[#allocation2] sm:$0xff] %vm94, %v374
    %405 = vst.msk [vmem:[#allocation2 + $0x8] sm:$0xff] %vm94, %v377
    %406 = vst.msk [vmem:[#allocation2 + $0x10] sm:$0xff] %vm94, %v382
    %407 = vst.msk [vmem:[#allocation2 + $0x18] sm:$0xff] %vm94, %v385
    %408 = vst.msk [vmem:[#allocation2 + $0x20] sm:$0xff] %vm94, %v390
    %409 = vst.msk [vmem:[#allocation2 + $0x28] sm:$0xff] %vm94, %v393
    %410 = vst.msk [vmem:[#allocation2 + $0x30] sm:$0xff] %vm94, %v398
    %411 = vst.msk [vmem:[#allocation2 + $0x38] sm:$0xff] %vm94, %v401
    // Predicated region
    $region22: #{feedforward.1} parent=1 // pred_check
      _
    $region23: #{feedforward.1} parent=1 // pred_check_branch
      %413 = sbr.rel (0) target = $region25
    $region24: #{feedforward.1} parent=1 // pred_region
      %s415 = ssub.s32 1024, 1024
      %416 = vsyncadd [#allocation3], %s415
      %s417 = sshll.u32 [#allocation2], 4
      %s418 = int_to_ptr.vmem [resolvable:$true] %s417
      %423 = dma.vmem_to_hbm [thread:$0]  %s418, 1024, %s5, [#allocation3], 128, 128, 8
    $region25: #{feedforward.1} parent=1 // pred_fallthru
      _
    // Predicated region
    $region26: #{feedforward.1} parent=1 // pred_check
      _
    $region27: #{feedforward.1} parent=1 // pred_check_branch
      %425 = sbr.rel (0) target = $region29
    $region28: #{feedforward.1} parent=1 // pred_region
      %426 = dma.done [#allocation3], 1024
    $region29: #{feedforward.1} parent=1 // pred_fallthru
      _
    %427 = vsyncpa [#allocation3], 1

</llo_original>
